<compile_context>
chip_gen: v5e
topology: v5e:2x2
jax: 0.10.0
libtpu: 0.0.40
codegen_flags: <defaults>
</compile_context>

<pallas_src>
import functools

import jax
import jax.numpy as jnp
from jax.experimental import pallas as pl
from jax.experimental.pallas import tpu as pltpu


def _conv1x1_kernel(x_ref, w_ref, b_ref, o_ref):
    # x_ref: (TM, K)  w_ref: (K, Cout)  b_ref: (1, Cout)  o_ref: (TM, Cout)
    acc = jnp.dot(x_ref[...], w_ref[...], preferred_element_type=jnp.float32)
    o_ref[...] = (acc + b_ref[...]).astype(o_ref.dtype)


def prepare_conv1x1_params(weight, bias):
    """One-time parameter prep (hoisted out of the per-call path).

    weight: (Cout, Cin, 1, 1) -> (Cin, Cout)
    bias  : (Cout,)           -> (1, Cout)
    """
    Cout, Cin, kh, kw = weight.shape
    assert kh == 1 and kw == 1, "only kernel_size=(1,1) is supported"
    w_mat = jnp.transpose(weight.reshape(Cout, Cin), (1, 0))  # (Cin, Cout)
    b_mat = bias.reshape(1, Cout)
    return w_mat, b_mat


def _conv1x1_rows(x_rows, w_mat, b_mat, *, tm):
    """GEMM over rows = N*H*W.  x_rows: (M, Cin) -> (M, Cout)."""
    M, Cin = x_rows.shape
    Cout = w_mat.shape[1]
    dtype = x_rows.dtype

    # Sublane minimum for the row tile, gated on dtype packing (f32: 8, bf16: 16).
    sub = max(8, 32 // jnp.dtype(dtype).itemsize)

    if M <= tm:
        # Single grid step; block_shape == full array dims, so exempt from the
        # (8,128) divisibility rule: no row padding, no post-slice.
        tm_eff = M
        m_pad = M
        x_in = x_rows
        grid = (1,)
    else:
        tm_eff = max(sub, (tm // sub) * sub)
        m_pad = pl.cdiv(M, tm_eff) * tm_eff
        x_in = jnp.pad(x_rows, ((0, m_pad - M), (0, 0))) if m_pad != M else x_rows
        grid = (m_pad // tm_eff,)

    itemsize = jnp.dtype(dtype).itemsize
    cost = pl.CostEstimate(
        flops=2 * m_pad * Cin * Cout,
        transcendentals=0,
        bytes_accessed=(m_pad * Cin + Cin * Cout + Cout + m_pad * Cout) * itemsize,
    )

    out = pl.pallas_call(
        _conv1x1_kernel,
        out_shape=jax.ShapeDtypeStruct((m_pad, Cout), dtype),
        grid=grid,
        in_specs=[
            pl.BlockSpec((tm_eff, Cin), lambda i: (i, 0)),
            # Weight & bias: constant index_map -> stay VMEM-resident across row tiles.
            pl.BlockSpec((Cin, Cout), lambda i: (0, 0)),
            pl.BlockSpec((1, Cout), lambda i: (0, 0)),
        ],
        out_specs=pl.BlockSpec((tm_eff, Cout), lambda i: (i, 0)),
        compiler_params=pltpu.CompilerParams(
            dimension_semantics=("parallel",)),
        cost_estimate=cost,
    )(x_in, w_mat, b_mat)

    if m_pad != M:
        out = out[:M]
    return out


def conv2d_1x1(x_nchw, w_mat, b_mat, *, tm=1024):
    """1x1 stride-1 Conv2d.  x_nchw: (N, Cin, H, W) -> (N, Cout, H, W).

    w_mat / b_mat come from prepare_conv1x1_params (hoisted out of hot path).
    `tm=1024` is the general-path row tile; for M <= tm the grid collapses to
    a single full-array block.  (On v7x, larger tm is fine as long as the
    double-buffered (tm, Cout) f32 output stays well under the 32 MiB scoped
    VMEM default.)
    """
    N, Cin, H, W = x_nchw.shape
    Cout = w_mat.shape[1]
    M = N * H * W
    # NCHW -> (rows, Cin).  Metadata-only for H = W = 1 (the module's case).
    x_rows = jnp.transpose(x_nchw, (0, 2, 3, 1)).reshape(M, Cin)
    out_rows = _conv1x1_rows(x_rows, w_mat, b_mat, tm=tm)
    return jnp.transpose(out_rows.reshape(N, H, W, Cout), (0, 3, 1, 2))


def make_conv2d_1x1(weight, bias, *, tm=1024):
    """Module-style factory: prep params once, return a jitted forward fn."""
    w_mat, b_mat = prepare_conv1x1_params(weight, bias)

    @jax.jit
    def forward(x_nchw):
        return conv2d_1x1(x_nchw, w_mat, b_mat, tm=tm)

    return forward


def _reference(x_nchw, weight, bias):
    """Plain-JAX reference (valid for any N, H, W)."""
    N, Cin, H, W = x_nchw.shape
    Cout = weight.shape[0]
    xr = jnp.transpose(x_nchw, (0, 2, 3, 1)).reshape(-1, Cin)
    out = xr @ weight.reshape(Cout, Cin).T + bias
    return jnp.transpose(out.reshape(N, H, W, Cout), (0, 3, 1, 2))


if __name__ == "__main__":
    # Shapes implied by the module: Conv2d(20, 480, kernel_size=1) on [1, 20, 1, 1].
    Nb, Cin, H, W = 1, 20, 1, 1
    Cout = 480

    key = jax.random.PRNGKey(0)
    kx, kw, kb, kx2, kx3 = jax.random.split(key, 5)

    x = jax.random.normal(kx, (Nb, Cin, H, W), dtype=jnp.float32)
    weight = jax.random.normal(kw, (Cout, Cin, 1, 1), dtype=jnp.float32) * (1.0 / jnp.sqrt(Cin))
    bias = jax.random.normal(kb, (Cout,), dtype=jnp.float32) * 0.01

    conv = make_conv2d_1x1(weight, bias)

    out = jax.block_until_ready(conv(x))
    assert out.shape == (Nb, Cout, H, W), out.shape
    ref = _reference(x, weight, bias)
    assert jnp.allclose(out, ref, atol=1e-5, rtol=1e-5)

    # Structural check of the gridded path (multiple row tiles, H*W > 1).
    w_mat, b_mat = prepare_conv1x1_params(weight, bias)
    x2 = jax.random.normal(kx2, (2, Cin, 4, 4), dtype=jnp.float32)   # M = 32
    out2 = jax.block_until_ready(conv2d_1x1(x2, w_mat, b_mat, tm=8))
    ref2 = _reference(x2, weight, bias)
    assert out2.shape == (2, Cout, 4, 4), out2.shape
    assert jnp.allclose(out2, ref2, atol=1e-3, rtol=1e-3)

    # Ragged-row path (M not a multiple of the row tile -> pad + slice branch).
    x3 = jax.random.normal(kx3, (1, Cin, 5, 5), dtype=jnp.float32)   # M = 25
    out3 = jax.block_until_ready(conv2d_1x1(x3, w_mat, b_mat, tm=8))
    ref3 = _reference(x3, weight, bias)
    assert out3.shape == (1, Cout, 5, 5), out3.shape
    assert jnp.allclose(out3, ref3, atol=1e-3, rtol=1e-3)

    print("KERNEL_OK")
</pallas_src>

<mosaic_0001>
module attributes {stable_mosaic.version = 11 : i64} {
  func.func @_conv1x1_kernel(%arg0: i32, %arg1: memref<1x20xf32, #tpu.memory_space<vmem>>, %arg2: memref<20x480xf32, #tpu.memory_space<vmem>>, %arg3: memref<1x480xf32, #tpu.memory_space<vmem>>, %arg4: memref<1x480xf32, #tpu.memory_space<vmem>>) attributes {dimension_semantics = [#tpu.dimension_semantics<parallel>], iteration_bounds = array<i64: 1>, scalar_prefetch = 0 : i64, scratch_operands = 0 : i64, tpu.core_type = #tpu.core_type<tc>, window_params = [{transform_indices = @transform_0, window_bounds = array<i64: 1, 20>}, {pipeline_mode = #tpu.pipeline_mode<synchronous>, transform_indices = @transform_1, window_bounds = array<i64: 20, 480>}, {pipeline_mode = #tpu.pipeline_mode<synchronous>, transform_indices = @transform_2, window_bounds = array<i64: 1, 480>}, {transform_indices = @transform_3, window_bounds = array<i64: 1, 480>}]} {
    %c0 = arith.constant 0 : index
    %c0_0 = arith.constant 0 : index
    %0 = vector.load %arg1[%c0, %c0_0] : memref<1x20xf32, #tpu.memory_space<vmem>>, vector<1x20xf32>
    %c0_1 = arith.constant 0 : index
    %c0_2 = arith.constant 0 : index
    %1 = vector.load %arg2[%c0_1, %c0_2] : memref<20x480xf32, #tpu.memory_space<vmem>>, vector<20x480xf32>
    %cst = arith.constant dense<0.000000e+00> : vector<1x480xf32>
    %2 = tpu.matmul %0, %1, %cst {dimension_numbers = #tpu.dot_dimension_numbers<[1], [0], [0], [1], [0, 0, 1, 1], [], []>} : vector<1x20xf32>, vector<20x480xf32>, vector<1x480xf32> -> vector<1x480xf32>
    %c0_3 = arith.constant 0 : index
    %c0_4 = arith.constant 0 : index
    %3 = vector.load %arg3[%c0_3, %c0_4] : memref<1x480xf32, #tpu.memory_space<vmem>>, vector<1x480xf32>
    %4 = arith.addf %2, %3 : vector<1x480xf32>
    %c0_5 = arith.constant 0 : index
    %c0_6 = arith.constant 0 : index
    %5 = vector.load %arg4[%c0_5, %c0_6] : memref<1x480xf32, #tpu.memory_space<vmem>>, vector<1x480xf32>
    tpu.vector_store %arg4[%c0_5, %c0_6], %4 {strides = array<i32>} : memref<1x480xf32, #tpu.memory_space<vmem>>, vector<1x480xf32>,
    return
  }
  func.func @transform_0(%arg0: i32) -> (i32, i32) {
    %c0_i32 = arith.constant 0 : i32
    %c0_i32_0 = arith.constant 0 : i32
    return %arg0, %c0_i32 : i32, i32
  }
  func.func @transform_1(%arg0: i32) -> (i32, i32) {
    %c0_i32 = arith.constant 0 : i32
    %c0_i32_0 = arith.constant 0 : i32
    %c0_i32_1 = arith.constant 0 : i32
    return %c0_i32, %c0_i32_0 : i32, i32
  }
  func.func @transform_2(%arg0: i32) -> (i32, i32) {
    %c0_i32 = arith.constant 0 : i32
    %c0_i32_0 = arith.constant 0 : i32
    %c0_i32_1 = arith.constant 0 : i32
    return %c0_i32, %c0_i32_0 : i32, i32
  }
  func.func @transform_3(%arg0: i32) -> (i32, i32) {
    %c0_i32 = arith.constant 0 : i32
    %c0_i32_0 = arith.constant 0 : i32
    return %arg0, %c0_i32 : i32, i32
  }
}

</mosaic_0001>

<llo_original>
// kernel: forward.1
$region0: #{forward.1}
  #allocation0 [shape = 'u32[]', space=smem, size = 0x4, offset = 0x4, fixed_abs, tag = 'smem constant byte address 0x4 - core index']
  #allocation1 [shape = 'u32[72,128]{1,0:T(1,128)}', space=vmem, size = 0x9000, scoped, tag = 'internal scratch']
  %s0 = inlined_call_operand.hbm [shape: f32[1,20], index: 0, kind: input, shape index: {}]
  %s1 = inlined_call_operand.hbm [shape: f32[20,480], index: 1, kind: input, shape index: {}]
  %s2 = inlined_call_operand.hbm [shape: f32[1,480], index: 2, kind: input, shape index: {}]
  %s3 = inlined_call_operand.hbm [shape: f32[1,480], index: 3, kind: output, shape index: {}]
  %s4 = sld [smem:[#allocation0]]
  $region34: #{forward.1} parent=0
    _
  %s6 = ssub.s32 1, %s4
  %s7 = scalar_select 0, %s6, %s4
  $region1: #{forward.1} parent=0
    #allocation2 [shape = 'u8[512]{0}', space=vmem, size = 0x400, scoped, tag = 'input window, operand 0, single buffered']
    #allocation3 [shape = 's32[1]{0}', space=sflag, size = 0x4, scoped, tag = 'scoped memory for forward.1']
    #allocation4 [shape = 's32[1]{0}', space=sflag, size = 0x4, scoped, tag = 'scoped memory for forward.1']
    #allocation5 [shape = 'u8[49152]{0}', space=vmem, size = 0xc000, scoped, tag = 'input window, operand 1, single buffered']
    #allocation6 [shape = 's32[1]{0}', space=sflag, size = 0x4, scoped, tag = 'scoped memory for forward.1']
    #allocation7 [shape = 'u8[2048]{0}', space=vmem, size = 0x800, scoped, tag = 'input window, operand 2, single buffered']
    #allocation8 [shape = 'u8[2048]{0}', space=vmem, size = 0x800, scoped, tag = 'output window, operand 0, single buffered']
    %8 = vsyncpa [#allocation3], 0
    %9 = vsyncpa [#allocation6], 0
    %10 = vsyncpa [#allocation4], 0
    // Predicated region
    $region2: #{forward.1} parent=1 // pred_check
      _
    $region3: #{forward.1} parent=1 // pred_check_branch
      %12 = sbr.rel (0) target = $region5
    $region4: #{forward.1} parent=1 // pred_region
      %14 = vsyncadd [#allocation3], 0
      %s16 = sshll.u32 %s0, 4
      %s17 = int_to_ptr.hbm [resolvable:$true] %s16
      %s18 = sshll.u32 [#allocation2], 4
      %s19 = int_to_ptr.vmem [resolvable:$true] %s18
      %21 = dma.hbm_to_vmem [thread:$0]  %s17, 16, %s19, [#allocation3]
    $region5: #{forward.1} parent=1 // pred_fallthru
      _
    // Predicated region
    $region6: #{forward.1} parent=1 // pred_check
      _
    $region7: #{forward.1} parent=1 // pred_check_branch
      %23 = sbr.rel (0) target = $region9
    $region8: #{forward.1} parent=1 // pred_region
      %25 = vsyncadd [#allocation6], 0
      %s26 = sshll.u32 %s1, 4
      %s27 = int_to_ptr.hbm [resolvable:$true] %s26
      %s28 = sshll.u32 [#allocation5], 4
      %s29 = int_to_ptr.vmem [resolvable:$true] %s28
      %34 = dma.hbm_to_vmem [thread:$0]  %s27, 1536, %s29, [#allocation6], 512, 512, 32
    $region9: #{forward.1} parent=1 // pred_fallthru
      _
    // Predicated region
    $region10: #{forward.1} parent=1 // pred_check
      _
    $region11: #{forward.1} parent=1 // pred_check_branch
      %36 = sbr.rel (0) target = $region13
    $region12: #{forward.1} parent=1 // pred_region
      %38 = vsyncadd [#allocation6], 0
      %s40 = sshll.u32 %s2, 4
      %s41 = int_to_ptr.hbm [resolvable:$true] %s40
      %s42 = sshll.u32 [#allocation7], 4
      %s43 = int_to_ptr.vmem [resolvable:$true] %s42
      %45 = dma.hbm_to_vmem [thread:$0]  %s41, 64, %s43, [#allocation6]
    $region13: #{forward.1} parent=1 // pred_fallthru
      _
    // Predicated region
    $region14: #{forward.1} parent=1 // pred_check
      _
    $region15: #{forward.1} parent=1 // pred_check_branch
      %47 = sbr.rel (0) target = $region17
    $region16: #{forward.1} parent=1 // pred_region
      %49 = dma.done [#allocation3], 16
    $region17: #{forward.1} parent=1 // pred_fallthru
      _
    // Predicated region
    $region18: #{forward.1} parent=1 // pred_check
      _
    $region19: #{forward.1} parent=1 // pred_check_branch
      %51 = sbr.rel (0) target = $region21
    $region20: #{forward.1} parent=1 // pred_region
      %53 = dma.done [#allocation6], 1536
    $region21: #{forward.1} parent=1 // pred_fallthru
      _
    // Predicated region
    $region22: #{forward.1} parent=1 // pred_check
      _
    $region23: #{forward.1} parent=1 // pred_check_branch
      %55 = sbr.rel (0) target = $region25
    $region24: #{forward.1} parent=1 // pred_region
      %57 = dma.done [#allocation6], 64
    $region25: #{forward.1} parent=1 // pred_fallthru
      _
    %v58 = vld [vmem:[#allocation2] sm:$0x1]
    %v59 = vld [vmem:[#allocation5] sm:$0xff]
    %v60 = vld [vmem:[#allocation5 + $0x8] sm:$0xff]
    %v61 = vld [vmem:[#allocation5 + $0x10] sm:$0xff]
    %v62 = vld [vmem:[#allocation5 + $0x18] sm:$0xff]
    %v63 = vld [vmem:[#allocation5 + $0x20] sm:$0xff]
    %v64 = vld [vmem:[#allocation5 + $0x28] sm:$0xff]
    %v65 = vld [vmem:[#allocation5 + $0x30] sm:$0xff]
    %v66 = vld [vmem:[#allocation5 + $0x38] sm:$0xff]
    %v67 = vld [vmem:[#allocation5 + $0x40] sm:$0xf]
    %v68 = vld [vmem:[#allocation5 + $0x48] sm:$0xf]
    %v69 = vld [vmem:[#allocation5 + $0x50] sm:$0xf]
    %v70 = vld [vmem:[#allocation5 + $0x58] sm:$0xf]
    %v71 = vld [vmem:[#allocation7] sm:$0xf]
    %v73 = vperm.slane %v71, 0
    %v74 = vperm.slane %v71, 1
    %v75 = vperm.slane %v71, 2
    %v76 = vperm.slane %v71, 3
    %vm81 = vcmask 162816
    %v83 = vsel %vm81, %v58, 0
    %vm85 = vcmask 1043456
    %v87 = vsel %vm85, %v67, 0
    %v90 = vsel %vm85, %v68, 0
    %v93 = vsel %vm85, %v69, 0
    %v96 = vsel %vm85, %v70, 0
    %98 = vmatpush.msra.mxu0 0.0
    %99 = vmatpush.msra.mxu0 0.0
    %100 = vmatpush.msra.mxu0 0.0
    %101 = vmatpush.msra.mxu0 0.0
    %102 = vmatpush.msra.mxu0 0.0
    %103 = vmatpush.msra.mxu0 0.0
    %104 = vmatpush.msra.mxu0 0.0
    %105 = vmatpush.msra.mxu0 0.0
    %106 = vmatpush.msra.mxu0 0.0
    %107 = vmatpush.msra.mxu0 0.0
    %108 = vmatpush.msra.mxu0 0.0
    %109 = vmatpush.msra.mxu0 0.0
    %110 = vmatpush.msra.mxu0 0.0
    %111 = vmatpush.msra.mxu0 %v87
    %112 = vmatpush.msra.mxu0 %v63
    %113 = vmatpush.msra.mxu0 %v59
    %114 = vmatmul.f32.gmra.mxu0 %v83
    %v115 = vpop.f32.mrf.mxu0
    %v116 = vadd.f32 %v73, %v115
    %117 = vdwg.mxu0
    %118 = vmatpush.msra.mxu0 0.0
    %119 = vmatpush.msra.mxu0 0.0
    %120 = vmatpush.msra.mxu0 0.0
    %121 = vmatpush.msra.mxu0 0.0
    %122 = vmatpush.msra.mxu0 0.0
    %123 = vmatpush.msra.mxu0 0.0
    %124 = vmatpush.msra.mxu0 0.0
    %125 = vmatpush.msra.mxu0 0.0
    %126 = vmatpush.msra.mxu0 0.0
    %127 = vmatpush.msra.mxu0 0.0
    %128 = vmatpush.msra.mxu0 0.0
    %129 = vmatpush.msra.mxu0 0.0
    %130 = vmatpush.msra.mxu0 0.0
    %131 = vmatpush.msra.mxu0 %v90
    %132 = vmatpush.msra.mxu0 %v64
    %133 = vmatpush.msra.mxu0 %v60
    %134 = vmatmul.f32.gmra.mxu0 %v83
    %v135 = vpop.f32.mrf.mxu0
    %v136 = vadd.f32 %v74, %v135
    %137 = vdwg.mxu0
    %138 = vmatpush.msra.mxu0 0.0
    %139 = vmatpush.msra.mxu0 0.0
    %140 = vmatpush.msra.mxu0 0.0
    %141 = vmatpush.msra.mxu0 0.0
    %142 = vmatpush.msra.mxu0 0.0
    %143 = vmatpush.msra.mxu0 0.0
    %144 = vmatpush.msra.mxu0 0.0
    %145 = vmatpush.msra.mxu0 0.0
    %146 = vmatpush.msra.mxu0 0.0
    %147 = vmatpush.msra.mxu0 0.0
    %148 = vmatpush.msra.mxu0 0.0
    %149 = vmatpush.msra.mxu0 0.0
    %150 = vmatpush.msra.mxu0 0.0
    %151 = vmatpush.msra.mxu0 %v93
    %152 = vmatpush.msra.mxu0 %v65
    %153 = vmatpush.msra.mxu0 %v61
    %154 = vmatmul.f32.gmra.mxu0 %v83
    %v155 = vpop.f32.mrf.mxu0
    %v156 = vadd.f32 %v75, %v155
    %157 = vdwg.mxu0
    %158 = vmatpush.msra.mxu0 0.0
    %159 = vmatpush.msra.mxu0 0.0
    %160 = vmatpush.msra.mxu0 0.0
    %161 = vmatpush.msra.mxu0 0.0
    %162 = vmatpush.msra.mxu0 0.0
    %163 = vmatpush.msra.mxu0 0.0
    %164 = vmatpush.msra.mxu0 0.0
    %165 = vmatpush.msra.mxu0 0.0
    %166 = vmatpush.msra.mxu0 0.0
    %167 = vmatpush.msra.mxu0 0.0
    %168 = vmatpush.msra.mxu0 0.0
    %169 = vmatpush.msra.mxu0 0.0
    %170 = vmatpush.msra.mxu0 0.0
    %171 = vmatpush.msra.mxu0 %v96
    %172 = vmatpush.msra.mxu0 %v66
    %173 = vmatpush.msra.mxu0 %v62
    %174 = vmatmul.f32.gmra.mxu0 %v83
    %v175 = vpop.f32.mrf.mxu0
    %v176 = vadd.f32 %v76, %v175
    %177 = vdwg.mxu0
    %v182 = vrot.slane %v136, 7
    %v183 = vrot.slane %v156, 6
    %v184 = vrot.slane %v176, 5
    %vm185 = vcmask 1040384
    %v186 = vsel %vm185, %v116, %v182
    %vm187 = vcmask 1042434
    %v188 = vsel %vm187, %v183, %v184
    %vm189 = vcmask 1041408
    %v190 = vsel %vm189, %v186, %v188
    %v192 = vlaneseq
    %vm193 = vcmp.ge.s32.totalorder %v192, 0
    %vm194 = vcmp.lt.s32.totalorder %v192, 480
    %vm195 = vmand %vm193, %vm194
    %196 = vst.msk [vmem:[#allocation8] sm:$0xf] %vm195, %v190
    // Predicated region
    $region26: #{forward.1} parent=1 // pred_check
      _
    $region27: #{forward.1} parent=1 // pred_check_branch
      %198 = sbr.rel (0) target = $region29
    $region28: #{forward.1} parent=1 // pred_region
      %200 = vsyncadd [#allocation4], 0
      %s202 = sshll.u32 [#allocation8], 4
      %s203 = int_to_ptr.vmem [resolvable:$true] %s202
      %s204 = sshll.u32 %s3, 4
      %s205 = int_to_ptr.hbm [resolvable:$true] %s204
      %207 = dma.vmem_to_hbm [thread:$0]  %s203, 64, %s205, [#allocation4]
    $region29: #{forward.1} parent=1 // pred_fallthru
      _
    // Predicated region
    $region30: #{forward.1} parent=1 // pred_check
      _
    $region31: #{forward.1} parent=1 // pred_check_branch
      %209 = sbr.rel (0) target = $region33
    $region32: #{forward.1} parent=1 // pred_region
      %211 = dma.done [#allocation4], 64
    $region33: #{forward.1} parent=1 // pred_fallthru
      _
    %212 = vsyncpa [#allocation3], 1
    %213 = vsyncpa [#allocation6], 1
    %214 = vsyncpa [#allocation4], 1

</llo_original>
